<compile_context>
chip_gen: v7x
topology: tpu7x:2x2x1
jax: 0.10.0
libtpu: 0.0.40
codegen_flags: <defaults>
</compile_context>

<pallas_src>
import functools

import jax
import jax.numpy as jnp
from jax.experimental import pallas as pl
from jax.experimental.pallas import tpu as pltpu


# ----------------------------------------------------------------------------
# One fused kernel: conv stack + MLP head for a tile of `bt` samples.
# ----------------------------------------------------------------------------
def simple_cnn_kernel(x_ref, w1_ref, b1_ref, w2_ref, b2_ref,
                      wf1_ref, bf1_ref, wf2_ref, bf2_ref, o_ref, *, l4, bt):
    """Row layout is time-major within the tile: row = m*bt + b, with m the
    pooled (stride-4) time index in [0, l4) and b the local sample in [0, bt).

    x_ref  : (R, 4)        polyphase input, col r = x[b, 4*m + r],  R = bt*l4
    w1_ref : (3, 128)      conv1 taps; lane block r (32 lanes) = position 4m+r
    b1_ref : (1, 128)      conv1 bias tiled x4
    w2_ref : (128, 128)    packed conv2 RHS: cols 0:64 even time, 64:128 odd
    b2_ref : (1, 128)      conv2 bias tiled x2
    wf1_ref: (l4, 64, 128) fc1 weight with the torch NCW flatten folded in
    bf1_ref: (1, 128)      fc1 bias
    wf2_ref: (1, 128)      fc2 weight
    bf2_ref: (1, 1)        fc2 bias
    o_ref  : (bt, 1)       sigmoid output
    """
    rows = bt * l4
    xr = x_ref[...]                                   # (R, 4)

    def prev_time(a):   # value at pooled time m-1 (zero rows for m == 0)
        pad = jnp.zeros((bt,) + a.shape[1:], a.dtype)
        return jnp.concatenate([pad, a[:rows - bt]], axis=0)

    def next_time(a):   # value at pooled time m+1 (zero rows for m == l4-1)
        pad = jnp.zeros((bt,) + a.shape[1:], a.dtype)
        return jnp.concatenate([a[bt:], pad], axis=0)

    x0, x1 = xr[:, 0:1], xr[:, 1:2]                   # x[4m],   x[4m+1]
    x2, x3 = xr[:, 2:3], xr[:, 3:4]                   # x[4m+2], x[4m+3]
    x3p = prev_time(x3)                               # x[4m-1] (0 at left edge)
    x0n = next_time(x0)                               # x[4m+4] (0 at right edge)

    # ---- conv1 (1->32, k=3, pad=1) + ReLU + pool1: one (R,128) VPU FMA set ----
    # lane block r holds conv1 at time t = 4m + r for all 32 output channels.
    def lane4(a, b, c, d):
        return jnp.concatenate(
            [jnp.broadcast_to(a, (rows, 32)), jnp.broadcast_to(b, (rows, 32)),
             jnp.broadcast_to(c, (rows, 32)), jnp.broadcast_to(d, (rows, 32))],
            axis=1)

    tm1 = lane4(x3p, x0, x1, x2)                      # taps at t-1
    t00 = lane4(x0, x1, x2, x3)                       # taps at t
    tp1 = lane4(x1, x2, x3, x0n)                      # taps at t+1
    w1 = w1_ref[...]
    c1 = jnp.maximum(tm1 * w1[0:1, :] + t00 * w1[1:2, :] + tp1 * w1[2:3, :]
                     + b1_ref[...], 0.0)              # (R, 128)
    p1e = jnp.maximum(c1[:, 0:32], c1[:, 32:64])      # pool1 @ time 2m    (R, 32)
    p1o = jnp.maximum(c1[:, 64:96], c1[:, 96:128])    # pool1 @ time 2m+1  (R, 32)

    # ---- conv2 (32->64, k=3, pad=1) + ReLU + pool2: ONE (R,128)x(128,128) dot --
    lhs2 = jnp.concatenate([p1e, p1o, prev_time(p1o), next_time(p1e)], axis=1)
    h2 = jnp.dot(lhs2, w2_ref[...], preferred_element_type=jnp.float32) + b2_ref[...]
    h2 = jnp.maximum(h2, 0.0)                         # cols 0:64 even, 64:128 odd
    p2 = jnp.maximum(h2[:, 0:64], h2[:, 64:128])      # pool2 @ time m     (R, 64)

    # ---- fc1 (folded NCW flatten) + ReLU: l4 accumulated (bt,64)x(64,128) dots -
    h = bf1_ref[...]                                  # (1,128); broadcasts on add
    for m in range(l4):                               # static unroll (l4 is small)
        h = h + jnp.dot(p2[m * bt:(m + 1) * bt, :], wf1_ref[m],
                        preferred_element_type=jnp.float32)
    h = jnp.maximum(h, 0.0)                           # (bt, 128)

    # ---- fc2 (128 -> 1) as a VPU multiply + cross-lane reduce, then sigmoid ----
    z = jnp.sum(h * wf2_ref[...], axis=-1, keepdims=True) + bf2_ref[...]  # (bt,1)
    # Head output is only bt floats per step, so a plain store/divide is noise;
    # pl.reciprocal(..., approx=True) on the EUP is available if it ever matters.
    o_ref[...] = 1.0 / (1.0 + jnp.exp(-z))


def simple_cnn_pallas(xr, prep, *, l4, bt, n_tiles):
    rows_per_tile = bt * l4
    kernel = functools.partial(simple_cnn_kernel, l4=l4, bt=bt)
    return pl.pallas_call(
        kernel,
        out_shape=jax.ShapeDtypeStruct((n_tiles * bt, 1), jnp.float32),
        grid=(n_tiles,),
        in_specs=[
            pl.BlockSpec((rows_per_tile, 4), lambda i: (i, 0)),   # input tile
            pl.BlockSpec((3, 128), lambda i: (0, 0)),             # conv1 w (resident)
            pl.BlockSpec((1, 128), lambda i: (0, 0)),             # conv1 b
            pl.BlockSpec((128, 128), lambda i: (0, 0)),           # packed conv2 w
            pl.BlockSpec((1, 128), lambda i: (0, 0)),             # conv2 b
            pl.BlockSpec((l4, 64, 128), lambda i: (0, 0, 0)),     # fc1 w (resident)
            pl.BlockSpec((1, 128), lambda i: (0, 0)),             # fc1 b
            pl.BlockSpec((1, 128), lambda i: (0, 0)),             # fc2 w
            pl.BlockSpec((1, 1), lambda i: (0, 0)),               # fc2 b
        ],
        out_specs=pl.BlockSpec((bt, 1), lambda i: (i, 0)),
        compiler_params=pltpu.CompilerParams(dimension_semantics=("parallel",)),
    )(xr, prep["conv1_w"], prep["conv1_b"], prep["conv2_w"], prep["conv2_b"],
      prep["fc1_w"], prep["fc1_b"], prep["fc2_w"], prep["fc2_b"])


# ----------------------------------------------------------------------------
# One-time parameter re-layout + forward wrapper
# ----------------------------------------------------------------------------
def prepare_params(params, input_dim):
    """One-time weight re-layout (host-side; not paid per forward)."""
    l4 = input_dim // 4
    # conv1.weight (32,1,3) -> (3,32) [k, cout], tiled x4 along lanes for the
    # four conv positions evaluated per polyphase row.
    w1 = jnp.transpose(params["conv1_w"][:, 0, :], (1, 0))           # (3, 32)
    w1 = jnp.tile(w1, (1, 4))                                        # (3, 128)
    b1 = jnp.tile(params["conv1_b"][None, :], (1, 4))                # (1, 128)
    # conv2.weight (64,32,3): pack the even/odd pool1-time outputs into one
    # (128,128) RHS. LHS lane blocks are [p1e | p1o | p1o_prev | p1e_next].
    w2k = [jnp.transpose(params["conv2_w"][:, :, k], (1, 0)) for k in range(3)]
    zero = jnp.zeros((32, 64), jnp.float32)
    even = jnp.concatenate([w2k[1], w2k[2], w2k[0], zero], axis=0)   # conv2 @ 2m
    odd = jnp.concatenate([w2k[0], w2k[1], zero, w2k[2]], axis=0)    # conv2 @ 2m+1
    w2p = jnp.concatenate([even, odd], axis=1)                       # (128, 128)
    b2 = jnp.tile(params["conv2_b"][None, :], (1, 2))                # (1, 128)
    # fc1.weight (128, 64*l4): torch NCW flatten index is cout*l4 + m. Fold it
    # into a per-time-slice layout (l4, 64, 128) so the kernel feeds fc1 with
    # contiguous (bt,64) x (64,128) dots (no runtime transpose of the features).
    wf1 = jnp.transpose(params["fc1_w"].reshape(128, 64, l4), (2, 1, 0))
    return {
        "conv1_w": w1, "conv1_b": b1,
        "conv2_w": w2p, "conv2_b": b2,
        "fc1_w": wf1, "fc1_b": params["fc1_b"][None, :],
        "fc2_w": params["fc2_w"],            # (1, 128)
        "fc2_b": params["fc2_b"][None, :],   # (1, 1)
    }


def simple_cnn_forward(x, prep, *, batch_tile=None):
    """x: (B, input_dim) float32 — mirrors SimpleCNN.forward(x)."""
    B, L = x.shape
    # TODO(synk): odd-length MaxPool1d (floor) is not handled; needs L % 4 == 0.
    assert L % 4 == 0 and L >= 8, "two stride-2 max-pools need input_dim % 4 == 0"
    l4 = L // 4

    if batch_tile is None:
        # ~512-2048 rows per grid step, fc1 M up to 128, minimal batch padding.
        batch_tile = min(128, -(-B // 8) * 8)
        batch_tile = max(8, min(batch_tile, max(8, (2048 // l4) // 8 * 8)))
    bt = batch_tile
    assert bt % 8 == 0

    bp = -(-B // bt) * bt
    if bp != B:
        x = jnp.pad(x, ((0, bp - B), (0, 0)))
    n_tiles = bp // bt

    # Per-tile time-major polyphase layout: row = m*bt + b, col r = x[b, 4m+r].
    # One small transpose of the input (the smallest tensor in the pipeline);
    # everything downstream then runs on contiguous, aligned slices.
    xr = (x.reshape(n_tiles, bt, l4, 4)
           .transpose(0, 2, 1, 3)
           .reshape(n_tiles * l4 * bt, 4))
    out = simple_cnn_pallas(xr, prep, l4=l4, bt=bt, n_tiles=n_tiles)   # (bp, 1)
    return out[:B]


# ----------------------------------------------------------------------------
# Pure-JAX reference (correctness check of the Pallas path)
# ----------------------------------------------------------------------------
def reference_forward(x, params):
    hp = jax.lax.Precision.HIGHEST

    def conv1d(inp_bcl, w, b):  # NCW conv, pad=1, k=3
        out = jax.lax.conv_general_dilated(
            inp_bcl, w, window_strides=(1,), padding=((1, 1),),
            dimension_numbers=("NCH", "OIH", "NCH"), precision=hp)
        return out + b[None, :, None]

    def pool(h):  # maxpool k=2, s=2 over last axis
        bsz, c, l = h.shape
        return h.reshape(bsz, c, l // 2, 2).max(axis=-1)

    h = pool(jax.nn.relu(conv1d(x[:, None, :], params["conv1_w"], params["conv1_b"])))
    h = pool(jax.nn.relu(conv1d(h, params["conv2_w"], params["conv2_b"])))
    h = h.reshape(h.shape[0], -1)
    h = jax.nn.relu(jnp.dot(h, params["fc1_w"].T, precision=hp) + params["fc1_b"])
    return jax.nn.sigmoid(jnp.dot(h, params["fc2_w"].T, precision=hp) + params["fc2_b"])


def init_params(key, input_dim):
    conv_output_dim = 64 * (input_dim // 4)
    ks = jax.random.split(key, 8)
    s = 0.1
    return {
        "conv1_w": s * jax.random.normal(ks[0], (32, 1, 3), jnp.float32),
        "conv1_b": s * jax.random.normal(ks[1], (32,), jnp.float32),
        "conv2_w": s * jax.random.normal(ks[2], (64, 32, 3), jnp.float32),
        "conv2_b": s * jax.random.normal(ks[3], (64,), jnp.float32),
        "fc1_w": s * jax.random.normal(ks[4], (128, conv_output_dim), jnp.float32),
        "fc1_b": s * jax.random.normal(ks[5], (128,), jnp.float32),
        "fc2_w": s * jax.random.normal(ks[6], (1, 128), jnp.float32),
        "fc2_b": s * jax.random.normal(ks[7], (1,), jnp.float32),
    }


if __name__ == "__main__":
    key = jax.random.PRNGKey(0)
    k_x1, k_x2, k_x3, k_p1, k_p2 = jax.random.split(key, 5)

    # Tolerance note: on the compiled Mosaic path the kernel's f32 MXU dots match
    # the HIGHEST-precision reference to ~1e-6; under Pallas interpret mode the
    # in-kernel dots fall back to XLA's default (bf16-pass) matmul precision, so
    # the check uses a 2e-3 tolerance that still catches any layout/indexing bug.
    def check(out, ref):
        assert out.shape == ref.shape
        assert bool(jnp.allclose(out, ref, atol=2e-3, rtol=2e-3)), (out, ref)

    # config 1: tiny shapes (B=2, input_dim=16)
    B1, L1 = 2, 16
    x1 = jax.random.normal(k_x1, (B1, L1), jnp.float32)
    params1 = init_params(k_p1, L1)
    prep1 = prepare_params(params1, L1)
    out1 = jax.block_until_ready(simple_cnn_forward(x1, prep1))
    check(out1, reference_forward(x1, params1))

    # config 2: batch padding (B=10 -> tile of 16) and a wider input
    B2, L2 = 10, 32
    x2 = jax.random.normal(k_x2, (B2, L2), jnp.float32)
    params2 = init_params(k_p2, L2)
    prep2 = prepare_params(params2, L2)
    out2 = jax.block_until_ready(simple_cnn_forward(x2, prep2))
    check(out2, reference_forward(x2, params2))

    # config 3: multi-step "parallel" grid (3 batch tiles of 16)
    B3 = 48
    x3 = jax.random.normal(k_x3, (B3, L2), jnp.float32)
    out3 = jax.block_until_ready(simple_cnn_forward(x3, prep2, batch_tile=16))
    check(out3, reference_forward(x3, params2))

    print("KERNEL_OK")
</pallas_src>

<mosaic_0001>
module attributes {stable_mosaic.version = 11 : i64} {
  func.func @simple_cnn_kernel(%arg0: i32, %arg1: memref<32x4xf32, #tpu.memory_space<vmem>>, %arg2: memref<3x128xf32, #tpu.memory_space<vmem>>, %arg3: memref<1x128xf32, #tpu.memory_space<vmem>>, %arg4: memref<128x128xf32, #tpu.memory_space<vmem>>, %arg5: memref<1x128xf32, #tpu.memory_space<vmem>>, %arg6: memref<4x64x128xf32, #tpu.memory_space<vmem>>, %arg7: memref<1x128xf32, #tpu.memory_space<vmem>>, %arg8: memref<1x128xf32, #tpu.memory_space<vmem>>, %arg9: memref<1x1xf32, #tpu.memory_space<vmem>>, %arg10: memref<8x1xf32, #tpu.memory_space<vmem>>) attributes {dimension_semantics = [#tpu.dimension_semantics<parallel>], iteration_bounds = array<i64: 1>, scalar_prefetch = 0 : i64, scratch_operands = 0 : i64, tpu.core_type = #tpu.core_type<tc>, window_params = [{transform_indices = @transform_0, window_bounds = array<i64: 32, 4>}, {pipeline_mode = #tpu.pipeline_mode<synchronous>, transform_indices = @transform_1, window_bounds = array<i64: 3, 128>}, {pipeline_mode = #tpu.pipeline_mode<synchronous>, transform_indices = @transform_2, window_bounds = array<i64: 1, 128>}, {pipeline_mode = #tpu.pipeline_mode<synchronous>, transform_indices = @transform_3, window_bounds = array<i64: 128, 128>}, {pipeline_mode = #tpu.pipeline_mode<synchronous>, transform_indices = @transform_4, window_bounds = array<i64: 1, 128>}, {pipeline_mode = #tpu.pipeline_mode<synchronous>, transform_indices = @transform_5, window_bounds = array<i64: 4, 64, 128>}, {pipeline_mode = #tpu.pipeline_mode<synchronous>, transform_indices = @transform_6, window_bounds = array<i64: 1, 128>}, {pipeline_mode = #tpu.pipeline_mode<synchronous>, transform_indices = @transform_7, window_bounds = array<i64: 1, 128>}, {pipeline_mode = #tpu.pipeline_mode<synchronous>, transform_indices = @transform_8, window_bounds = array<i64: 1, 1>}, {transform_indices = @transform_9, window_bounds = array<i64: 8, 1>}]} {
    %c0 = arith.constant 0 : index
    %c0_0 = arith.constant 0 : index
    %0 = vector.load %arg1[%c0, %c0_0] : memref<32x4xf32, #tpu.memory_space<vmem>>, vector<32x4xf32>
    %1 = vector.extract_strided_slice %0 {offsets = [0, 0], sizes = [32, 1], strides = [1, 1]} : vector<32x4xf32> to vector<32x1xf32>
    %2 = vector.extract_strided_slice %0 {offsets = [0, 1], sizes = [32, 1], strides = [1, 1]} : vector<32x4xf32> to vector<32x1xf32>
    %3 = vector.extract_strided_slice %0 {offsets = [0, 2], sizes = [32, 1], strides = [1, 1]} : vector<32x4xf32> to vector<32x1xf32>
    %4 = vector.extract_strided_slice %0 {offsets = [0, 3], sizes = [32, 1], strides = [1, 1]} : vector<32x4xf32> to vector<32x1xf32>
    %cst = arith.constant 0.000000e+00 : f32
    %5 = vector.broadcast %cst : f32 to vector<8x1xf32>
    %6 = vector.extract_strided_slice %4 {offsets = [0, 0], sizes = [24, 1], strides = [1, 1]} : vector<32x1xf32> to vector<24x1xf32>
    %7 = tpu.concatenate %5, %6 in 0 : vector<8x1xf32>, vector<24x1xf32> -> vector<32x1xf32>
    %cst_1 = arith.constant 0.000000e+00 : f32
    %8 = vector.broadcast %cst_1 : f32 to vector<8x1xf32>
    %9 = vector.extract_strided_slice %1 {offsets = [8, 0], sizes = [24, 1], strides = [1, 1]} : vector<32x1xf32> to vector<24x1xf32>
    %10 = tpu.concatenate %9, %8 in 0 : vector<24x1xf32>, vector<8x1xf32> -> vector<32x1xf32>
    %11 = vector.shape_cast %7 : vector<32x1xf32> to vector<32x1xf32>
    %12 = vector.broadcast %11 : vector<32x1xf32> to vector<32x32xf32>
    %13 = vector.shape_cast %1 : vector<32x1xf32> to vector<32x1xf32>
    %14 = vector.broadcast %13 : vector<32x1xf32> to vector<32x32xf32>
    %15 = vector.shape_cast %2 : vector<32x1xf32> to vector<32x1xf32>
    %16 = vector.broadcast %15 : vector<32x1xf32> to vector<32x32xf32>
    %17 = vector.shape_cast %3 : vector<32x1xf32> to vector<32x1xf32>
    %18 = vector.broadcast %17 : vector<32x1xf32> to vector<32x32xf32>
    %19 = tpu.concatenate %12, %14, %16, %18 in 1 : vector<32x32xf32>, vector<32x32xf32>, vector<32x32xf32>, vector<32x32xf32> -> vector<32x128xf32>
    %20 = vector.shape_cast %1 : vector<32x1xf32> to vector<32x1xf32>
    %21 = vector.broadcast %20 : vector<32x1xf32> to vector<32x32xf32>
    %22 = vector.shape_cast %2 : vector<32x1xf32> to vector<32x1xf32>
    %23 = vector.broadcast %22 : vector<32x1xf32> to vector<32x32xf32>
    %24 = vector.shape_cast %3 : vector<32x1xf32> to vector<32x1xf32>
    %25 = vector.broadcast %24 : vector<32x1xf32> to vector<32x32xf32>
    %26 = vector.shape_cast %4 : vector<32x1xf32> to vector<32x1xf32>
    %27 = vector.broadcast %26 : vector<32x1xf32> to vector<32x32xf32>
    %28 = tpu.concatenate %21, %23, %25, %27 in 1 : vector<32x32xf32>, vector<32x32xf32>, vector<32x32xf32>, vector<32x32xf32> -> vector<32x128xf32>
    %29 = vector.shape_cast %2 : vector<32x1xf32> to vector<32x1xf32>
    %30 = vector.broadcast %29 : vector<32x1xf32> to vector<32x32xf32>
    %31 = vector.shape_cast %3 : vector<32x1xf32> to vector<32x1xf32>
    %32 = vector.broadcast %31 : vector<32x1xf32> to vector<32x32xf32>
    %33 = vector.shape_cast %4 : vector<32x1xf32> to vector<32x1xf32>
    %34 = vector.broadcast %33 : vector<32x1xf32> to vector<32x32xf32>
    %35 = vector.shape_cast %10 : vector<32x1xf32> to vector<32x1xf32>
    %36 = vector.broadcast %35 : vector<32x1xf32> to vector<32x32xf32>
    %37 = tpu.concatenate %30, %32, %34, %36 in 1 : vector<32x32xf32>, vector<32x32xf32>, vector<32x32xf32>, vector<32x32xf32> -> vector<32x128xf32>
    %c0_2 = arith.constant 0 : index
    %c0_3 = arith.constant 0 : index
    %38 = vector.load %arg2[%c0_2, %c0_3] : memref<3x128xf32, #tpu.memory_space<vmem>>, vector<3x128xf32>
    %39 = vector.extract_strided_slice %38 {offsets = [0, 0], sizes = [1, 128], strides = [1, 1]} : vector<3x128xf32> to vector<1x128xf32>
    %40 = vector.broadcast %39 : vector<1x128xf32> to vector<32x128xf32>
    %41 = arith.mulf %19, %40 : vector<32x128xf32>
    %42 = vector.extract_strided_slice %38 {offsets = [1, 0], sizes = [1, 128], strides = [1, 1]} : vector<3x128xf32> to vector<1x128xf32>
    %43 = vector.broadcast %42 : vector<1x128xf32> to vector<32x128xf32>
    %44 = arith.mulf %28, %43 : vector<32x128xf32>
    %45 = arith.addf %41, %44 : vector<32x128xf32>
    %46 = vector.extract_strided_slice %38 {offsets = [2, 0], sizes = [1, 128], strides = [1, 1]} : vector<3x128xf32> to vector<1x128xf32>
    %47 = vector.broadcast %46 : vector<1x128xf32> to vector<32x128xf32>
    %48 = arith.mulf %37, %47 : vector<32x128xf32>
    %49 = arith.addf %45, %48 : vector<32x128xf32>
    %c0_4 = arith.constant 0 : index
    %c0_5 = arith.constant 0 : index
    %50 = vector.load %arg3[%c0_4, %c0_5] : memref<1x128xf32, #tpu.memory_space<vmem>>, vector<1x128xf32>
    %51 = vector.broadcast %50 : vector<1x128xf32> to vector<32x128xf32>
    %52 = arith.addf %49, %51 : vector<32x128xf32>
    %cst_6 = arith.constant 0.000000e+00 : f32
    %53 = vector.broadcast %cst_6 : f32 to vector<32x128xf32>
    %54 = arith.maximumf %52, %53 : vector<32x128xf32>
    %55 = vector.extract_strided_slice %54 {offsets = [0, 0], sizes = [32, 32], strides = [1, 1]} : vector<32x128xf32> to vector<32x32xf32>
    %56 = vector.extract_strided_slice %54 {offsets = [0, 32], sizes = [32, 32], strides = [1, 1]} : vector<32x128xf32> to vector<32x32xf32>
    %57 = arith.maximumf %55, %56 : vector<32x32xf32>
    %58 = vector.extract_strided_slice %54 {offsets = [0, 64], sizes = [32, 32], strides = [1, 1]} : vector<32x128xf32> to vector<32x32xf32>
    %59 = vector.extract_strided_slice %54 {offsets = [0, 96], sizes = [32, 32], strides = [1, 1]} : vector<32x128xf32> to vector<32x32xf32>
    %60 = arith.maximumf %58, %59 : vector<32x32xf32>
    %cst_7 = arith.constant 0.000000e+00 : f32
    %61 = vector.broadcast %cst_7 : f32 to vector<8x32xf32>
    %62 = vector.extract_strided_slice %60 {offsets = [0, 0], sizes = [24, 32], strides = [1, 1]} : vector<32x32xf32> to vector<24x32xf32>
    %63 = tpu.concatenate %61, %62 in 0 : vector<8x32xf32>, vector<24x32xf32> -> vector<32x32xf32>
    %cst_8 = arith.constant 0.000000e+00 : f32
    %64 = vector.broadcast %cst_8 : f32 to vector<8x32xf32>
    %65 = vector.extract_strided_slice %57 {offsets = [8, 0], sizes = [24, 32], strides = [1, 1]} : vector<32x32xf32> to vector<24x32xf32>
    %66 = tpu.concatenate %65, %64 in 0 : vector<24x32xf32>, vector<8x32xf32> -> vector<32x32xf32>
    %67 = tpu.concatenate %57, %60, %63, %66 in 1 : vector<32x32xf32>, vector<32x32xf32>, vector<32x32xf32>, vector<32x32xf32> -> vector<32x128xf32>
    %c0_9 = arith.constant 0 : index
    %c0_10 = arith.constant 0 : index
    %68 = vector.load %arg4[%c0_9, %c0_10] : memref<128x128xf32, #tpu.memory_space<vmem>>, vector<128x128xf32>
    %cst_11 = arith.constant dense<0.000000e+00> : vector<32x128xf32>
    %69 = tpu.matmul %67, %68, %cst_11 {dimension_numbers = #tpu.dot_dimension_numbers<[1], [0], [0], [1], [0, 0, 1, 1], [], []>} : vector<32x128xf32>, vector<128x128xf32>, vector<32x128xf32> -> vector<32x128xf32>
    %c0_12 = arith.constant 0 : index
    %c0_13 = arith.constant 0 : index
    %70 = vector.load %arg5[%c0_12, %c0_13] : memref<1x128xf32, #tpu.memory_space<vmem>>, vector<1x128xf32>
    %71 = vector.broadcast %70 : vector<1x128xf32> to vector<32x128xf32>
    %72 = arith.addf %69, %71 : vector<32x128xf32>
    %cst_14 = arith.constant 0.000000e+00 : f32
    %73 = vector.broadcast %cst_14 : f32 to vector<32x128xf32>
    %74 = arith.maximumf %72, %73 : vector<32x128xf32>
    %75 = vector.extract_strided_slice %74 {offsets = [0, 0], sizes = [32, 64], strides = [1, 1]} : vector<32x128xf32> to vector<32x64xf32>
    %76 = vector.extract_strided_slice %74 {offsets = [0, 64], sizes = [32, 64], strides = [1, 1]} : vector<32x128xf32> to vector<32x64xf32>
    %77 = arith.maximumf %75, %76 : vector<32x64xf32>
    %c0_15 = arith.constant 0 : index
    %c0_16 = arith.constant 0 : index
    %78 = vector.load %arg7[%c0_15, %c0_16] : memref<1x128xf32, #tpu.memory_space<vmem>>, vector<1x128xf32>
    %79 = vector.extract_strided_slice %77 {offsets = [0, 0], sizes = [8, 64], strides = [1, 1]} : vector<32x64xf32> to vector<8x64xf32>
    %c0_17 = arith.constant 0 : index
    %c0_18 = arith.constant 0 : index
    %c0_19 = arith.constant 0 : index
    %80 = vector.load %arg6[%c0_17, %c0_18, %c0_19] : memref<4x64x128xf32, #tpu.memory_space<vmem>>, vector<1x64x128xf32>
    %81 = vector.shape_cast %80 : vector<1x64x128xf32> to vector<64x128xf32>
    %cst_20 = arith.constant dense<0.000000e+00> : vector<8x128xf32>
    %82 = tpu.matmul %79, %81, %cst_20 {dimension_numbers = #tpu.dot_dimension_numbers<[1], [0], [0], [1], [0, 0, 1, 1], [], []>} : vector<8x64xf32>, vector<64x128xf32>, vector<8x128xf32> -> vector<8x128xf32>
    %83 = vector.broadcast %78 : vector<1x128xf32> to vector<8x128xf32>
    %84 = arith.addf %83, %82 : vector<8x128xf32>
    %85 = vector.extract_strided_slice %77 {offsets = [8, 0], sizes = [8, 64], strides = [1, 1]} : vector<32x64xf32> to vector<8x64xf32>
    %c1 = arith.constant 1 : index
    %c0_21 = arith.constant 0 : index
    %c0_22 = arith.constant 0 : index
    %86 = vector.load %arg6[%c1, %c0_21, %c0_22] : memref<4x64x128xf32, #tpu.memory_space<vmem>>, vector<1x64x128xf32>
    %87 = vector.shape_cast %86 : vector<1x64x128xf32> to vector<64x128xf32>
    %cst_23 = arith.constant dense<0.000000e+00> : vector<8x128xf32>
    %88 = tpu.matmul %85, %87, %cst_23 {dimension_numbers = #tpu.dot_dimension_numbers<[1], [0], [0], [1], [0, 0, 1, 1], [], []>} : vector<8x64xf32>, vector<64x128xf32>, vector<8x128xf32> -> vector<8x128xf32>
    %89 = arith.addf %84, %88 : vector<8x128xf32>
    %90 = vector.extract_strided_slice %77 {offsets = [16, 0], sizes = [8, 64], strides = [1, 1]} : vector<32x64xf32> to vector<8x64xf32>
    %c2 = arith.constant 2 : index
    %c0_24 = arith.constant 0 : index
    %c0_25 = arith.constant 0 : index
    %91 = vector.load %arg6[%c2, %c0_24, %c0_25] : memref<4x64x128xf32, #tpu.memory_space<vmem>>, vector<1x64x128xf32>
    %92 = vector.shape_cast %91 : vector<1x64x128xf32> to vector<64x128xf32>
    %cst_26 = arith.constant dense<0.000000e+00> : vector<8x128xf32>
    %93 = tpu.matmul %90, %92, %cst_26 {dimension_numbers = #tpu.dot_dimension_numbers<[1], [0], [0], [1], [0, 0, 1, 1], [], []>} : vector<8x64xf32>, vector<64x128xf32>, vector<8x128xf32> -> vector<8x128xf32>
    %94 = arith.addf %89, %93 : vector<8x128xf32>
    %95 = vector.extract_strided_slice %77 {offsets = [24, 0], sizes = [8, 64], strides = [1, 1]} : vector<32x64xf32> to vector<8x64xf32>
    %c3 = arith.constant 3 : index
    %c0_27 = arith.constant 0 : index
    %c0_28 = arith.constant 0 : index
    %96 = vector.load %arg6[%c3, %c0_27, %c0_28] : memref<4x64x128xf32, #tpu.memory_space<vmem>>, vector<1x64x128xf32>
    %97 = vector.shape_cast %96 : vector<1x64x128xf32> to vector<64x128xf32>
    %cst_29 = arith.constant dense<0.000000e+00> : vector<8x128xf32>
    %98 = tpu.matmul %95, %97, %cst_29 {dimension_numbers = #tpu.dot_dimension_numbers<[1], [0], [0], [1], [0, 0, 1, 1], [], []>} : vector<8x64xf32>, vector<64x128xf32>, vector<8x128xf32> -> vector<8x128xf32>
    %99 = arith.addf %94, %98 : vector<8x128xf32>
    %cst_30 = arith.constant 0.000000e+00 : f32
    %100 = vector.broadcast %cst_30 : f32 to vector<8x128xf32>
    %101 = arith.maximumf %99, %100 : vector<8x128xf32>
    %c0_31 = arith.constant 0 : index
    %c0_32 = arith.constant 0 : index
    %102 = vector.load %arg8[%c0_31, %c0_32] : memref<1x128xf32, #tpu.memory_space<vmem>>, vector<1x128xf32>
    %103 = vector.broadcast %102 : vector<1x128xf32> to vector<8x128xf32>
    %104 = arith.mulf %101, %103 : vector<8x128xf32>
    %cst_33 = arith.constant dense<0.000000e+00> : vector<8xf32>
    %105 = vector.multi_reduction <add>, %104, %cst_33 [1] : vector<8x128xf32> to vector<8xf32>
    %106 = vector.shape_cast %105 : vector<8xf32> to vector<8x1xf32>
    %c0_34 = arith.constant 0 : index
    %c0_35 = arith.constant 0 : index
    %107 = vector.load %arg9[%c0_34, %c0_35] : memref<1x1xf32, #tpu.memory_space<vmem>>, vector<1x1xf32>
    %108 = vector.broadcast %107 : vector<1x1xf32> to vector<8x1xf32>
    %109 = arith.addf %106, %108 : vector<8x1xf32>
    %cst_36 = arith.constant 0.000000e+00 : f32
    %110 = vector.broadcast %cst_36 : f32 to vector<8x1xf32>
    %111 = arith.subf %110, %109 : vector<8x1xf32>
    %112 = math.exp %111 : vector<8x1xf32>
    %cst_37 = arith.constant 1.000000e+00 : f32
    %113 = vector.broadcast %cst_37 : f32 to vector<8x1xf32>
    %114 = arith.addf %113, %112 : vector<8x1xf32>
    %cst_38 = arith.constant 1.000000e+00 : f32
    %115 = vector.broadcast %cst_38 : f32 to vector<8x1xf32>
    %116 = arith.divf %115, %114 : vector<8x1xf32>
    %c0_39 = arith.constant 0 : index
    %c0_40 = arith.constant 0 : index
    %117 = vector.load %arg10[%c0_39, %c0_40] : memref<8x1xf32, #tpu.memory_space<vmem>>, vector<8x1xf32>
    tpu.vector_store %arg10[%c0_39, %c0_40], %116 {strides = array<i32>} : memref<8x1xf32, #tpu.memory_space<vmem>>, vector<8x1xf32>,
    return
  }
  func.func @transform_0(%arg0: i32) -> (i32, i32) {
    %c0_i32 = arith.constant 0 : i32
    %c0_i32_0 = arith.constant 0 : i32
    return %arg0, %c0_i32 : i32, i32
  }
  func.func @transform_1(%arg0: i32) -> (i32, i32) {
    %c0_i32 = arith.constant 0 : i32
    %c0_i32_0 = arith.constant 0 : i32
    %c0_i32_1 = arith.constant 0 : i32
    return %c0_i32, %c0_i32_0 : i32, i32
  }
  func.func @transform_2(%arg0: i32) -> (i32, i32) {
    %c0_i32 = arith.constant 0 : i32
    %c0_i32_0 = arith.constant 0 : i32
    %c0_i32_1 = arith.constant 0 : i32
    return %c0_i32, %c0_i32_0 : i32, i32
  }
  func.func @transform_3(%arg0: i32) -> (i32, i32) {
    %c0_i32 = arith.constant 0 : i32
    %c0_i32_0 = arith.constant 0 : i32
    %c0_i32_1 = arith.constant 0 : i32
    return %c0_i32, %c0_i32_0 : i32, i32
  }
  func.func @transform_4(%arg0: i32) -> (i32, i32) {
    %c0_i32 = arith.constant 0 : i32
    %c0_i32_0 = arith.constant 0 : i32
    %c0_i32_1 = arith.constant 0 : i32
    return %c0_i32, %c0_i32_0 : i32, i32
  }
  func.func @transform_5(%arg0: i32) -> (i32, i32, i32) {
    %c0_i32 = arith.constant 0 : i32
    %c0_i32_0 = arith.constant 0 : i32
    %c0_i32_1 = arith.constant 0 : i32
    %c0_i32_2 = arith.constant 0 : i32
    return %c0_i32, %c0_i32_0, %c0_i32_1 : i32, i32, i32
  }
  func.func @transform_6(%arg0: i32) -> (i32, i32) {
    %c0_i32 = arith.constant 0 : i32
    %c0_i32_0 = arith.constant 0 : i32
    %c0_i32_1 = arith.constant 0 : i32
    return %c0_i32, %c0_i32_0 : i32, i32
  }
  func.func @transform_7(%arg0: i32) -> (i32, i32) {
    %c0_i32 = arith.constant 0 : i32
    %c0_i32_0 = arith.constant 0 : i32
    %c0_i32_1 = arith.constant 0 : i32
    return %c0_i32, %c0_i32_0 : i32, i32
  }
  func.func @transform_8(%arg0: i32) -> (i32, i32) {
    %c0_i32 = arith.constant 0 : i32
    %c0_i32_0 = arith.constant 0 : i32
    %c0_i32_1 = arith.constant 0 : i32
    return %c0_i32, %c0_i32_0 : i32, i32
  }
  func.func @transform_9(%arg0: i32) -> (i32, i32) {
    %c0_i32 = arith.constant 0 : i32
    %c0_i32_0 = arith.constant 0 : i32
    return %arg0, %c0_i32 : i32, i32
  }
}

</mosaic_0001>

<llo_original>
// kernel: tpu_custom_call.1
$region0: #{tpu_custom_call.1}
  #allocation0 [shape = 'u32[]', space=smem, size = 0x4, offset = 0x4, fixed_abs, tag = 'smem constant byte address 0x4 - core index']
  #allocation1 [shape = 'u32[144,128]{1,0:T(1,128)}', space=vmem, size = 0x12000, scoped, tag = 'internal scratch']
  #allocation2 [shape = 'f32[1,1]{1,0:T(1,128)S(1)}', space=vmem, size = 0x200, scoped, tag = 'scoped memory for tpu_custom_call.1']
  %s0 = inlined_call_operand.vmem [shape: f32[32,4], index: 0, kind: input, shape index: {}]
  %s1 = inlined_call_operand.vmem [shape: f32[3,128], index: 1, kind: input, shape index: {}]
  %s2 = inlined_call_operand.vmem [shape: f32[1,128], index: 2, kind: input, shape index: {}]
  %s3 = inlined_call_operand.hbm [shape: f32[128,128], index: 3, kind: input, shape index: {}]
  %s4 = inlined_call_operand.vmem [shape: f32[1,128], index: 4, kind: input, shape index: {}]
  %s5 = inlined_call_operand.hbm [shape: f32[4,64,128], index: 5, kind: input, shape index: {}]
  %s6 = inlined_call_operand.vmem [shape: f32[1,128], index: 6, kind: input, shape index: {}]
  %s7 = inlined_call_operand.vmem [shape: f32[1,128], index: 7, kind: input, shape index: {}]
  %s8 = inlined_call_operand.<no memory space> [shape: f32[1,1], index: 8, kind: input, shape index: {}]
  %s9 = inlined_call_operand.vmem [shape: f32[8,1], index: 9, kind: output, shape index: {}]
  %s10 = sld [smem:[#allocation0]]
  $region54: #{tpu_custom_call.1} parent=0
    _
  %s12 = ssub.s32 1, %s10
  %s13 = scalar_select 0, %s12, %s10
  %v14 = vstv %s8
  %15 = vst [vmem:[#allocation2] sm:$0x1] %v14
  $region1: #{tpu_custom_call.1} parent=0
    #allocation3 [shape = 'u8[65536]{0}', space=vmem, size = 0x10000, scoped, tag = 'input window, operand 3, single buffered']
    #allocation4 [shape = 's32[1]{0}', space=sflag, size = 0x4, scoped, tag = 'scoped memory for tpu_custom_call.1']
    #allocation5 [shape = 'u8[131072]{0}', space=vmem, size = 0x20000, scoped, tag = 'input window, operand 5, single buffered']
    #allocation6 [shape = 's32[1]{0}', space=sflag, size = 0x4, scoped, tag = 'scoped memory for tpu_custom_call.1']
    %16 = vsyncpa [#allocation4], 0
    %17 = vsyncpa [#allocation6], 0
    // Predicated region
    $region2: #{tpu_custom_call.1} parent=1 // pred_check
      _
    $region3: #{tpu_custom_call.1} parent=1 // pred_check_branch
      %19 = sbr.rel (0) target = $region5
    $region4: #{tpu_custom_call.1} parent=1 // pred_region
      _
    $region5: #{tpu_custom_call.1} parent=1 // pred_fallthru
      _
    // Predicated region
    $region6: #{tpu_custom_call.1} parent=1 // pred_check
      _
    $region7: #{tpu_custom_call.1} parent=1 // pred_check_branch
      %21 = sbr.rel (0) target = $region9
    $region8: #{tpu_custom_call.1} parent=1 // pred_region
      _
    $region9: #{tpu_custom_call.1} parent=1 // pred_fallthru
      _
    // Predicated region
    $region10: #{tpu_custom_call.1} parent=1 // pred_check
      _
    $region11: #{tpu_custom_call.1} parent=1 // pred_check_branch
      %23 = sbr.rel (0) target = $region13
    $region12: #{tpu_custom_call.1} parent=1 // pred_region
      _
    $region13: #{tpu_custom_call.1} parent=1 // pred_fallthru
      _
    // Predicated region
    $region14: #{tpu_custom_call.1} parent=1 // pred_check
      _
    $region15: #{tpu_custom_call.1} parent=1 // pred_check_branch
      %25 = sbr.rel (0) target = $region17
    $region16: #{tpu_custom_call.1} parent=1 // pred_region
      %s27 = ssub.s32 2048, 2048
      %28 = vsyncadd [#allocation4], %s27
      %s29 = sshll.u32 [#allocation3], 4
      %s30 = int_to_ptr.vmem [resolvable:$true] %s29
      %35 = dma.hbm_to_vmem [thread:$0]  %s3, 2048, %s30, [#allocation4], 128, 128, 8
    $region17: #{tpu_custom_call.1} parent=1 // pred_fallthru
      _
    // Predicated region
    $region18: #{tpu_custom_call.1} parent=1 // pred_check
      _
    $region19: #{tpu_custom_call.1} parent=1 // pred_check_branch
      %37 = sbr.rel (0) target = $region21
    $region20: #{tpu_custom_call.1} parent=1 // pred_region
      _
    $region21: #{tpu_custom_call.1} parent=1 // pred_fallthru
      _
    // Predicated region
    $region22: #{tpu_custom_call.1} parent=1 // pred_check
      _
    $region23: #{tpu_custom_call.1} parent=1 // pred_check_branch
      %39 = sbr.rel (0) target = $region25
    $region24: #{tpu_custom_call.1} parent=1 // pred_region
      %s41 = ssub.s32 4096, 4096
      %42 = vsyncadd [#allocation6], %s41
      %s43 = sshll.u32 [#allocation5], 4
      %s44 = int_to_ptr.vmem [resolvable:$true] %s43
      %49 = dma.hbm_to_vmem [thread:$0]  %s5, 4096, %s44, [#allocation6], 128, 128, 8
    $region25: #{tpu_custom_call.1} parent=1 // pred_fallthru
      _
    // Predicated region
    $region26: #{tpu_custom_call.1} parent=1 // pred_check
      _
    $region27: #{tpu_custom_call.1} parent=1 // pred_check_branch
      %51 = sbr.rel (0) target = $region29
    $region28: #{tpu_custom_call.1} parent=1 // pred_region
      _
    $region29: #{tpu_custom_call.1} parent=1 // pred_fallthru
      _
    // Predicated region
    $region30: #{tpu_custom_call.1} parent=1 // pred_check
      _
    $region31: #{tpu_custom_call.1} parent=1 // pred_check_branch
      %53 = sbr.rel (0) target = $region33
    $region32: #{tpu_custom_call.1} parent=1 // pred_region
      _
    $region33: #{tpu_custom_call.1} parent=1 // pred_fallthru
      _
    // Predicated region
    $region34: #{tpu_custom_call.1} parent=1 // pred_check
      _
    $region35: #{tpu_custom_call.1} parent=1 // pred_check_branch
      %55 = sbr.rel (0) target = $region37
    $region36: #{tpu_custom_call.1} parent=1 // pred_region
      _
    $region37: #{tpu_custom_call.1} parent=1 // pred_fallthru
      _
    // Predicated region
    $region38: #{tpu_custom_call.1} parent=1 // pred_check
      _
    $region39: #{tpu_custom_call.1} parent=1 // pred_check_branch
      %57 = sbr.rel (0) target = $region41
    $region40: #{tpu_custom_call.1} parent=1 // pred_region
      %58 = dma.done [#allocation4], 2048
    $region41: #{tpu_custom_call.1} parent=1 // pred_fallthru
      _
    // Predicated region
    $region42: #{tpu_custom_call.1} parent=1 // pred_check
      _
    $region43: #{tpu_custom_call.1} parent=1 // pred_check_branch
      %60 = sbr.rel (0) target = $region45
    $region44: #{tpu_custom_call.1} parent=1 // pred_region
      %61 = dma.done [#allocation6], 4096
    $region45: #{tpu_custom_call.1} parent=1 // pred_fallthru
      _
    %v62 = vld [vmem:[%s0] sm:$0xff]
    %v63 = vld [vmem:[%s0 + $0x8] sm:$0xff]
    %v64 = vld [vmem:[%s0 + $0x10] sm:$0xff]
    %v65 = vld [vmem:[%s0 + $0x18] sm:$0xff]
    %69 = vrot.lane.b32.xlu0 %v62, 125
    %v70 = vpop.permute.xlu0 %69
    %71 = vrot.lane.b32.xlu0 %v63, 125
    %v72 = vpop.permute.xlu0 %71
    %73 = vrot.lane.b32.xlu0 %v64, 125
    %v74 = vpop.permute.xlu0 %73
    %76 = vset.pattern.permute.xlu0 0
    %77 = vperm.xlu0 %76, 0.0
    %v78 = vpop.permute.xlu0 %77
    %80 = vset.pattern.permute.xlu0 0
    %81 = vperm.xlu0 %80, %v70
    %v82 = vpop.permute.xlu0 %81
    %84 = vset.pattern.permute.xlu0 0
    %85 = vperm.xlu0 %84, %v72
    %v86 = vpop.permute.xlu0 %85
    %88 = vset.pattern.permute.xlu0 0
    %89 = vperm.xlu0 %88, %v74
    %v90 = vpop.permute.xlu0 %89
    %92 = vset.pattern.permute.xlu0 0
    %93 = vperm.xlu0 %92, %v62
    %v94 = vpop.permute.xlu0 %93
    %96 = vset.pattern.permute.xlu0 0
    %97 = vperm.xlu0 %96, %v63
    %v98 = vpop.permute.xlu0 %97
    %100 = vset.pattern.permute.xlu0 0
    %101 = vperm.xlu0 %100, %v64
    %v102 = vpop.permute.xlu0 %101
    %105 = vset.pattern.permute.xlu0 0
    %106 = vperm.xlu0 %105, %v65
    %v107 = vpop.permute.xlu0 %106
    %109 = vset.pattern.permute.xlu0 1
    %110 = vperm.xlu0 %109, %v62
    %v111 = vpop.permute.xlu0 %110
    %113 = vset.pattern.permute.xlu0 1
    %114 = vperm.xlu0 %113, %v63
    %v115 = vpop.permute.xlu0 %114
    %117 = vset.pattern.permute.xlu0 1
    %118 = vperm.xlu0 %117, %v64
    %v119 = vpop.permute.xlu0 %118
    %121 = vset.pattern.permute.xlu0 1
    %122 = vperm.xlu0 %121, %v65
    %v123 = vpop.permute.xlu0 %122
    %125 = vset.pattern.permute.xlu0 2
    %126 = vperm.xlu0 %125, %v62
    %v127 = vpop.permute.xlu0 %126
    %129 = vset.pattern.permute.xlu0 2
    %130 = vperm.xlu0 %129, %v63
    %v131 = vpop.permute.xlu0 %130
    %133 = vset.pattern.permute.xlu0 2
    %134 = vperm.xlu0 %133, %v64
    %v135 = vpop.permute.xlu0 %134
    %137 = vset.pattern.permute.xlu0 2
    %138 = vperm.xlu0 %137, %v65
    %v139 = vpop.permute.xlu0 %138
    %vm141 = vcmask 261120
    %v142 = vsel %vm141, %v78, %v94
    %v143 = vsel %vm141, %v82, %v98
    %v144 = vsel %vm141, %v86, %v102
    %v145 = vsel %vm141, %v90, %v107
    %vm146 = vcmask 523264
    %v147 = vsel %vm146, %v142, %v111
    %v148 = vsel %vm146, %v143, %v115
    %v149 = vsel %vm146, %v144, %v119
    %v150 = vsel %vm146, %v145, %v123
    %vm151 = vcmask 785408
    %v152 = vsel %vm151, %v147, %v127
    %v153 = vsel %vm151, %v148, %v131
    %v154 = vsel %vm151, %v149, %v135
    %v155 = vsel %vm151, %v150, %v139
    %156 = vset.pattern.permute.xlu0 3
    %157 = vperm.xlu0 %156, %v62
    %v158 = vpop.permute.xlu0 %157
    %160 = vset.pattern.permute.xlu0 3
    %161 = vperm.xlu0 %160, %v63
    %v162 = vpop.permute.xlu0 %161
    %164 = vset.pattern.permute.xlu0 3
    %165 = vperm.xlu0 %164, %v64
    %v166 = vpop.permute.xlu0 %165
    %168 = vset.pattern.permute.xlu0 3
    %169 = vperm.xlu0 %168, %v65
    %v170 = vpop.permute.xlu0 %169
    %v172 = vsel %vm141, %v94, %v111
    %v173 = vsel %vm141, %v98, %v115
    %v174 = vsel %vm141, %v102, %v119
    %v175 = vsel %vm141, %v107, %v123
    %v176 = vsel %vm146, %v172, %v127
    %v177 = vsel %vm146, %v173, %v131
    %v178 = vsel %vm146, %v174, %v135
    %v179 = vsel %vm146, %v175, %v139
    %v180 = vsel %vm151, %v176, %v158
    %v181 = vsel %vm151, %v177, %v162
    %v182 = vsel %vm151, %v178, %v166
    %v183 = vsel %vm151, %v179, %v170
    %v184 = vsel %vm141, %v111, %v127
    %v185 = vsel %vm141, %v115, %v131
    %v186 = vsel %vm141, %v119, %v135
    %v187 = vsel %vm141, %v123, %v139
    %v188 = vsel %vm146, %v184, %v158
    %v189 = vsel %vm146, %v185, %v162
    %v190 = vsel %vm146, %v186, %v166
    %v191 = vsel %vm146, %v187, %v170
    %v192 = vsel %vm151, %v188, %v98
    %v193 = vsel %vm151, %v189, %v102
    %v194 = vsel %vm151, %v190, %v107
    %v195 = vsel %vm151, %v191, %v78
    %v196 = vld [vmem:[%s1] sm:$0x7]
    %v197 = vlaneseq
    %v198 = vshrl.u32 %v197, 7
    %v199 = vsub.s32 0, %v198
    %v200 = vrot.slane %v196, %v199
    %v201 = vmul.f32 %v152, %v200
    %v202 = vmul.f32 %v153, %v200
    %v203 = vmul.f32 %v154, %v200
    %v204 = vmul.f32 %v155, %v200
    %v205 = vlaneseq
    %v206 = vshrl.u32 %v205, 7
    %v207 = vsub.s32 1, %v206
    %v208 = vrot.slane %v196, %v207
    %v209 = vmul.f32 %v180, %v208
    %v210 = vmul.f32 %v181, %v208
    %v211 = vmul.f32 %v182, %v208
    %v212 = vmul.f32 %v183, %v208
    %v213 = vadd.f32 %v201, %v209
    %v214 = vadd.f32 %v202, %v210
    %v215 = vadd.f32 %v203, %v211
    %v216 = vadd.f32 %v204, %v212
    %v217 = vlaneseq
    %v218 = vshrl.u32 %v217, 7
    %v219 = vsub.s32 2, %v218
    %v220 = vrot.slane %v196, %v219
    %v221 = vmul.f32 %v192, %v220
    %v222 = vmul.f32 %v193, %v220
    %v223 = vmul.f32 %v194, %v220
    %v224 = vmul.f32 %v195, %v220
    %v225 = vadd.f32 %v213, %v221
    %v226 = vadd.f32 %v214, %v222
    %v227 = vadd.f32 %v215, %v223
    %v228 = vadd.f32 %v216, %v224
    %v229 = vld [vmem:[%s2] sm:$0x1]
    %v231 = vlaneseq
    %v232 = vshrl.u32 %v231, 7
    %v233 = vsub.s32 0, %v232
    %v234 = vrot.slane %v229, %v233
    %v236 = vadd.f32 %v225, %v234
    %v237 = vadd.f32 %v226, %v234
    %v238 = vadd.f32 %v227, %v234
    %v239 = vadd.f32 %v228, %v234
    %v240 = vmax.f32 %v236, 0.0
    %v241 = vmax.f32 %v237, 0.0
    %v242 = vmax.f32 %v238, 0.0
    %v243 = vmax.f32 %v239, 0.0
    %248 = vrot.lane.b32.xlu0 %v240, 96
    %v249 = vpop.permute.xlu0 %248
    %250 = vrot.lane.b32.xlu0 %v241, 96
    %v251 = vpop.permute.xlu0 %250
    %252 = vrot.lane.b32.xlu0 %v242, 96
    %v253 = vpop.permute.xlu0 %252
    %254 = vrot.lane.b32.xlu0 %v243, 96
    %v255 = vpop.permute.xlu0 %254
    %v260 = vmax.f32 %v240, %v249
    %v261 = vmax.f32 %v241, %v251
    %v262 = vmax.f32 %v242, %v253
    %v263 = vmax.f32 %v243, %v255
    %267 = vrot.lane.b32.xlu0 %v260, 64
    %v268 = vpop.permute.xlu0 %267
    %269 = vrot.lane.b32.xlu0 %v261, 64
    %v270 = vpop.permute.xlu0 %269
    %271 = vrot.lane.b32.xlu0 %v262, 64
    %v272 = vpop.permute.xlu0 %271
    %274 = vrot.lane.b32.xlu0 %v260, 96
    %v275 = vpop.permute.xlu0 %274
    %276 = vrot.lane.b32.xlu0 %v261, 96
    %v277 = vpop.permute.xlu0 %276
    %278 = vrot.lane.b32.xlu0 %v262, 96
    %v279 = vpop.permute.xlu0 %278
    %280 = vrot.lane.b32.xlu0 %v263, 96
    %v281 = vpop.permute.xlu0 %280
    %286 = vrot.lane.b32.xlu0 0.0, 64
    %v287 = vpop.permute.xlu0 %286
    %288 = vrot.lane.b32.xlu0 %v268, 64
    %v289 = vpop.permute.xlu0 %288
    %290 = vrot.lane.b32.xlu0 %v270, 64
    %v291 = vpop.permute.xlu0 %290
    %292 = vrot.lane.b32.xlu0 %v272, 64
    %v293 = vpop.permute.xlu0 %292
    %298 = vrot.lane.b32.xlu0 0.0, 96
    %v299 = vpop.permute.xlu0 %298
    %v301 = vsel %vm141, %v260, %v275
    %v302 = vsel %vm141, %v261, %v277
    %v303 = vsel %vm141, %v262, %v279
    %v304 = vsel %vm141, %v263, %v281
    %v305 = vsel %vm146, %v301, %v287
    %v306 = vsel %vm146, %v302, %v289
    %v307 = vsel %vm146, %v303, %v291
    %v308 = vsel %vm146, %v304, %v293
    %v309 = vsel %vm151, %v305, %v277
    %v310 = vsel %vm151, %v306, %v279
    %v311 = vsel %vm151, %v307, %v281
    %v312 = vsel %vm151, %v308, %v299
    %v313 = vld [vmem:[#allocation3] sm:$0xff]
    %v314 = vld [vmem:[#allocation3 + $0x8] sm:$0xff]
    %v315 = vld [vmem:[#allocation3 + $0x10] sm:$0xff]
    %v316 = vld [vmem:[#allocation3 + $0x18] sm:$0xff]
    %v317 = vld [vmem:[#allocation3 + $0x20] sm:$0xff]
    %v318 = vld [vmem:[#allocation3 + $0x28] sm:$0xff]
    %v319 = vld [vmem:[#allocation3 + $0x30] sm:$0xff]
    %v320 = vld [vmem:[#allocation3 + $0x38] sm:$0xff]
    %v321 = vld [vmem:[#allocation3 + $0x40] sm:$0xff]
    %v322 = vld [vmem:[#allocation3 + $0x48] sm:$0xff]
    %v323 = vld [vmem:[#allocation3 + $0x50] sm:$0xff]
    %v324 = vld [vmem:[#allocation3 + $0x58] sm:$0xff]
    %v325 = vld [vmem:[#allocation3 + $0x60] sm:$0xff]
    %v326 = vld [vmem:[#allocation3 + $0x68] sm:$0xff]
    %v327 = vld [vmem:[#allocation3 + $0x70] sm:$0xff]
    %v328 = vld [vmem:[#allocation3 + $0x78] sm:$0xff]
    %v329 = vld [vmem:[%s4] sm:$0x1]
    %v331 = vlaneseq
    %v332 = vshrl.u32 %v331, 7
    %v333 = vsub.s32 0, %v332
    %v334 = vrot.slane %v329, %v333
    %336 = vmatprep.subr.mxu0 0.0
    %337 = vmatpush1.msra.mxu0 %v313
    %338 = vmatprep.subr.mxu0 0.0
    %339 = vmatpush1.msra.mxu0 %v314
    %340 = vmatprep.subr.mxu0 0.0
    %341 = vmatpush1.msra.mxu0 %v315
    %342 = vmatprep.subr.mxu0 0.0
    %343 = vmatpush1.msra.mxu0 %v316
    %344 = vmatprep.subr.mxu0 0.0
    %345 = vmatpush1.msra.mxu0 %v317
    %346 = vmatprep.subr.mxu0 0.0
    %347 = vmatpush1.msra.mxu0 %v318
    %348 = vmatprep.subr.mxu0 0.0
    %349 = vmatpush1.msra.mxu0 %v319
    %350 = vmatprep.subr.mxu0 0.0
    %351 = vmatpush1.msra.mxu0 %v320
    %352 = vmatprep.subr.mxu0 0.0
    %353 = vmatpush1.msra.mxu0 %v321
    %354 = vmatprep.subr.mxu0 0.0
    %355 = vmatpush1.msra.mxu0 %v322
    %356 = vmatprep.subr.mxu0 0.0
    %357 = vmatpush1.msra.mxu0 %v323
    %358 = vmatprep.subr.mxu0 0.0
    %359 = vmatpush1.msra.mxu0 %v324
    %360 = vmatprep.subr.mxu0 0.0
    %361 = vmatpush1.msra.mxu0 %v325
    %362 = vmatprep.subr.mxu0 0.0
    %363 = vmatpush1.msra.mxu0 %v326
    %364 = vmatprep.subr.mxu0 0.0
    %365 = vmatpush1.msra.mxu0 %v327
    %366 = vmatprep.subr.mxu0 0.0
    %367 = vmatpush1.msra.mxu0 %v328
    %368 = vmatprep.subr.mxu0 0.0
    %369 = vmatpush1.msra.mxu0 0.0
    %370 = vmatprep.subr.mxu0 0.0
    %371 = vmatpush1.msra.mxu0 0.0
    %372 = vmatprep.subr.mxu0 0.0
    %373 = vmatpush1.msra.mxu0 0.0
    %374 = vmatprep.subr.mxu0 0.0
    %375 = vmatpush1.msra.mxu0 0.0
    %376 = vmatprep.subr.mxu0 0.0
    %377 = vmatpush1.msra.mxu0 0.0
    %378 = vmatprep.subr.mxu0 0.0
    %379 = vmatpush1.msra.mxu0 0.0
    %380 = vmatprep.subr.mxu0 0.0
    %381 = vmatpush1.msra.mxu0 0.0
    %382 = vmatprep.subr.mxu0 0.0
    %383 = vmatpush1.msra.mxu0 0.0
    %384 = vmatprep.subr.mxu0 0.0
    %385 = vmatpush1.msra.mxu0 0.0
    %386 = vmatprep.subr.mxu0 0.0
    %387 = vmatpush1.msra.mxu0 0.0
    %388 = vmatprep.subr.mxu0 0.0
    %389 = vmatpush1.msra.mxu0 0.0
    %390 = vmatprep.subr.mxu0 0.0
    %391 = vmatpush1.msra.mxu0 0.0
    %392 = vmatprep.subr.mxu0 0.0
    %393 = vmatpush1.msra.mxu0 0.0
    %394 = vmatprep.subr.mxu0 0.0
    %395 = vmatpush1.msra.mxu0 0.0
    %396 = vmatprep.subr.mxu0 0.0
    %397 = vmatpush1.msra.mxu0 0.0
    %398 = vmatprep.subr.mxu0 0.0
    %399 = vmatpush1.msra.mxu0 0.0
    %400 = vmatprep.mubr.f32.mxu0 0.0
    %401 = vmatmul.mubr.f32.gmra.mrb[0].mxu0 %v309
    %v402 = vpop.f32.mrb[0].mxu0
    %v403 = vadd.f32 %v334, %v402
    %v404 = vpop.f32.mrb[0].mxu0
    %405 = vmatprep.mubr.f32.mxu0 0.0
    %406 = vmatmul.mubr.f32.gmra.mrb[0].mxu0 %v310
    %v407 = vpop.f32.mrb[0].mxu0
    %v408 = vadd.f32 %v334, %v407
    %v409 = vpop.f32.mrb[0].mxu0
    %410 = vmatprep.mubr.f32.mxu0 0.0
    %411 = vmatmul.mubr.f32.gmra.mrb[0].mxu0 %v311
    %v412 = vpop.f32.mrb[0].mxu0
    %v413 = vadd.f32 %v334, %v412
    %v414 = vpop.f32.mrb[0].mxu0
    %415 = vmatprep.mubr.f32.mxu0 0.0
    %416 = vmatmul.mubr.f32.gmra.mrb[0].mxu0 %v312
    %v417 = vpop.f32.mrb[0].mxu0
    %v418 = vadd.f32 %v334, %v417
    %v419 = vpop.f32.mrb[0].mxu0
    %420 = vdwg.mxu0
    %v421 = vmax.f32 %v403, 0.0
    %v422 = vmax.f32 %v408, 0.0
    %v423 = vmax.f32 %v413, 0.0
    %v424 = vmax.f32 %v418, 0.0
    %429 = vrot.lane.b32.xlu0 %v421, 64
    %v430 = vpop.permute.xlu0 %429
    %431 = vrot.lane.b32.xlu0 %v422, 64
    %v432 = vpop.permute.xlu0 %431
    %433 = vrot.lane.b32.xlu0 %v423, 64
    %v434 = vpop.permute.xlu0 %433
    %435 = vrot.lane.b32.xlu0 %v424, 64
    %v436 = vpop.permute.xlu0 %435
    %v441 = vmax.f32 %v421, %v430
    %v442 = vmax.f32 %v422, %v432
    %v443 = vmax.f32 %v423, %v434
    %v444 = vmax.f32 %v424, %v436
    %v445 = vld [vmem:[%s6] sm:$0x1]
    %v446 = vld [vmem:[#allocation5] sm:$0xff]
    %v447 = vld [vmem:[#allocation5 + $0x8] sm:$0xff]
    %v448 = vld [vmem:[#allocation5 + $0x10] sm:$0xff]
    %v449 = vld [vmem:[#allocation5 + $0x18] sm:$0xff]
    %v450 = vld [vmem:[#allocation5 + $0x20] sm:$0xff]
    %v451 = vld [vmem:[#allocation5 + $0x28] sm:$0xff]
    %v452 = vld [vmem:[#allocation5 + $0x30] sm:$0xff]
    %v453 = vld [vmem:[#allocation5 + $0x38] sm:$0xff]
    %v455 = vsel %vm146, %v441, 0
    %457 = vmatprep.subr.mxu0 0.0
    %458 = vmatpush1.msra.mxu0 %v446
    %459 = vmatprep.subr.mxu0 0.0
    %460 = vmatpush1.msra.mxu0 %v447
    %461 = vmatprep.subr.mxu0 0.0
    %462 = vmatpush1.msra.mxu0 %v448
    %463 = vmatprep.subr.mxu0 0.0
    %464 = vmatpush1.msra.mxu0 %v449
    %465 = vmatprep.subr.mxu0 0.0
    %466 = vmatpush1.msra.mxu0 %v450
    %467 = vmatprep.subr.mxu0 0.0
    %468 = vmatpush1.msra.mxu0 %v451
    %469 = vmatprep.subr.mxu0 0.0
    %470 = vmatpush1.msra.mxu0 %v452
    %471 = vmatprep.subr.mxu0 0.0
    %472 = vmatpush1.msra.mxu0 %v453
    %473 = vmatprep.subr.mxu0 0.0
    %474 = vmatpush1.msra.mxu0 0.0
    %475 = vmatprep.subr.mxu0 0.0
    %476 = vmatpush1.msra.mxu0 0.0
    %477 = vmatprep.subr.mxu0 0.0
    %478 = vmatpush1.msra.mxu0 0.0
    %479 = vmatprep.subr.mxu0 0.0
    %480 = vmatpush1.msra.mxu0 0.0
    %481 = vmatprep.subr.mxu0 0.0
    %482 = vmatpush1.msra.mxu0 0.0
    %483 = vmatprep.subr.mxu0 0.0
    %484 = vmatpush1.msra.mxu0 0.0
    %485 = vmatprep.subr.mxu0 0.0
    %486 = vmatpush1.msra.mxu0 0.0
    %487 = vmatprep.subr.mxu0 0.0
    %488 = vmatpush1.msra.mxu0 0.0
    %489 = vmatprep.subr.mxu0 0.0
    %490 = vmatpush1.msra.mxu0 0.0
    %491 = vmatprep.subr.mxu0 0.0
    %492 = vmatpush1.msra.mxu0 0.0
    %493 = vmatprep.subr.mxu0 0.0
    %494 = vmatpush1.msra.mxu0 0.0
    %495 = vmatprep.subr.mxu0 0.0
    %496 = vmatpush1.msra.mxu0 0.0
    %497 = vmatprep.subr.mxu0 0.0
    %498 = vmatpush1.msra.mxu0 0.0
    %499 = vmatprep.subr.mxu0 0.0
    %500 = vmatpush1.msra.mxu0 0.0
    %501 = vmatprep.subr.mxu0 0.0
    %502 = vmatpush1.msra.mxu0 0.0
    %503 = vmatprep.subr.mxu0 0.0
    %504 = vmatpush1.msra.mxu0 0.0
    %505 = vmatprep.subr.mxu0 0.0
    %506 = vmatpush1.msra.mxu0 0.0
    %507 = vmatprep.subr.mxu0 0.0
    %508 = vmatpush1.msra.mxu0 0.0
    %509 = vmatprep.subr.mxu0 0.0
    %510 = vmatpush1.msra.mxu0 0.0
    %511 = vmatprep.subr.mxu0 0.0
    %512 = vmatpush1.msra.mxu0 0.0
    %513 = vmatprep.subr.mxu0 0.0
    %514 = vmatpush1.msra.mxu0 0.0
    %515 = vmatprep.subr.mxu0 0.0
    %516 = vmatpush1.msra.mxu0 0.0
    %517 = vmatprep.subr.mxu0 0.0
    %518 = vmatpush1.msra.mxu0 0.0
    %519 = vmatprep.subr.mxu0 0.0
    %520 = vmatpush1.msra.mxu0 0.0
    %521 = vmatprep.mubr.f32.mxu0 0.0
    %522 = vmatmul.mubr.f32.gmra.mrb[0].mxu0 %v455
    %v523 = vpop.f32.mrb[0].mxu0
    %v524 = vadd.f32 0.0, %v523
    %v525 = vpop.f32.mrb[0].mxu0
    %526 = vdwg.mxu0
    %v528 = vlaneseq
    %v529 = vshrl.u32 %v528, 7
    %v530 = vsub.s32 0, %v529
    %v531 = vrot.slane %v445, %v530
    %v533 = vadd.f32 %v531, %v524
    %s534 = scalar_lea.vmem [#allocation5], 64
    %v535 = vld [vmem:[%s534] sm:$0xff]
    %v536 = vld [vmem:[%s534 + $0x8] sm:$0xff]
    %v537 = vld [vmem:[%s534 + $0x10] sm:$0xff]
    %v538 = vld [vmem:[%s534 + $0x18] sm:$0xff]
    %v539 = vld [vmem:[%s534 + $0x20] sm:$0xff]
    %v540 = vld [vmem:[%s534 + $0x28] sm:$0xff]
    %v541 = vld [vmem:[%s534 + $0x30] sm:$0xff]
    %v542 = vld [vmem:[%s534 + $0x38] sm:$0xff]
    %v544 = vsel %vm146, %v442, 0
    %546 = vmatprep.subr.mxu0 0.0
    %547 = vmatpush1.msra.mxu0 %v535
    %548 = vmatprep.subr.mxu0 0.0
    %549 = vmatpush1.msra.mxu0 %v536
    %550 = vmatprep.subr.mxu0 0.0
    %551 = vmatpush1.msra.mxu0 %v537
    %552 = vmatprep.subr.mxu0 0.0
    %553 = vmatpush1.msra.mxu0 %v538
    %554 = vmatprep.subr.mxu0 0.0
    %555 = vmatpush1.msra.mxu0 %v539
    %556 = vmatprep.subr.mxu0 0.0
    %557 = vmatpush1.msra.mxu0 %v540
    %558 = vmatprep.subr.mxu0 0.0
    %559 = vmatpush1.msra.mxu0 %v541
    %560 = vmatprep.subr.mxu0 0.0
    %561 = vmatpush1.msra.mxu0 %v542
    %562 = vmatprep.subr.mxu0 0.0
    %563 = vmatpush1.msra.mxu0 0.0
    %564 = vmatprep.subr.mxu0 0.0
    %565 = vmatpush1.msra.mxu0 0.0
    %566 = vmatprep.subr.mxu0 0.0
    %567 = vmatpush1.msra.mxu0 0.0
    %568 = vmatprep.subr.mxu0 0.0
    %569 = vmatpush1.msra.mxu0 0.0
    %570 = vmatprep.subr.mxu0 0.0
    %571 = vmatpush1.msra.mxu0 0.0
    %572 = vmatprep.subr.mxu0 0.0
    %573 = vmatpush1.msra.mxu0 0.0
    %574 = vmatprep.subr.mxu0 0.0
    %575 = vmatpush1.msra.mxu0 0.0
    %576 = vmatprep.subr.mxu0 0.0
    %577 = vmatpush1.msra.mxu0 0.0
    %578 = vmatprep.subr.mxu0 0.0
    %579 = vmatpush1.msra.mxu0 0.0
    %580 = vmatprep.subr.mxu0 0.0
    %581 = vmatpush1.msra.mxu0 0.0
    %582 = vmatprep.subr.mxu0 0.0
    %583 = vmatpush1.msra.mxu0 0.0
    %584 = vmatprep.subr.mxu0 0.0
    %585 = vmatpush1.msra.mxu0 0.0
    %586 = vmatprep.subr.mxu0 0.0
    %587 = vmatpush1.msra.mxu0 0.0
    %588 = vmatprep.subr.mxu0 0.0
    %589 = vmatpush1.msra.mxu0 0.0
    %590 = vmatprep.subr.mxu0 0.0
    %591 = vmatpush1.msra.mxu0 0.0
    %592 = vmatprep.subr.mxu0 0.0
    %593 = vmatpush1.msra.mxu0 0.0
    %594 = vmatprep.subr.mxu0 0.0
    %595 = vmatpush1.msra.mxu0 0.0
    %596 = vmatprep.subr.mxu0 0.0
    %597 = vmatpush1.msra.mxu0 0.0
    %598 = vmatprep.subr.mxu0 0.0
    %599 = vmatpush1.msra.mxu0 0.0
    %600 = vmatprep.subr.mxu0 0.0
    %601 = vmatpush1.msra.mxu0 0.0
    %602 = vmatprep.subr.mxu0 0.0
    %603 = vmatpush1.msra.mxu0 0.0
    %604 = vmatprep.subr.mxu0 0.0
    %605 = vmatpush1.msra.mxu0 0.0
    %606 = vmatprep.subr.mxu0 0.0
    %607 = vmatpush1.msra.mxu0 0.0
    %608 = vmatprep.subr.mxu0 0.0
    %609 = vmatpush1.msra.mxu0 0.0
    %610 = vmatprep.mubr.f32.mxu0 0.0
    %611 = vmatmul.mubr.f32.gmra.mrb[0].mxu0 %v544
    %v612 = vpop.f32.mrb[0].mxu0
    %v613 = vadd.f32 0.0, %v612
    %v614 = vpop.f32.mrb[0].mxu0
    %615 = vdwg.mxu0
    %v616 = vadd.f32 %v533, %v613
    %s617 = scalar_lea.vmem [#allocation5], 128
    %v618 = vld [vmem:[%s617] sm:$0xff]
    %v619 = vld [vmem:[%s617 + $0x8] sm:$0xff]
    %v620 = vld [vmem:[%s617 + $0x10] sm:$0xff]
    %v621 = vld [vmem:[%s617 + $0x18] sm:$0xff]
    %v622 = vld [vmem:[%s617 + $0x20] sm:$0xff]
    %v623 = vld [vmem:[%s617 + $0x28] sm:$0xff]
    %v624 = vld [vmem:[%s617 + $0x30] sm:$0xff]
    %v625 = vld [vmem:[%s617 + $0x38] sm:$0xff]
    %v627 = vsel %vm146, %v443, 0
    %629 = vmatprep.subr.mxu0 0.0
    %630 = vmatpush1.msra.mxu0 %v618
    %631 = vmatprep.subr.mxu0 0.0
    %632 = vmatpush1.msra.mxu0 %v619
    %633 = vmatprep.subr.mxu0 0.0
    %634 = vmatpush1.msra.mxu0 %v620
    %635 = vmatprep.subr.mxu0 0.0
    %636 = vmatpush1.msra.mxu0 %v621
    %637 = vmatprep.subr.mxu0 0.0
    %638 = vmatpush1.msra.mxu0 %v622
    %639 = vmatprep.subr.mxu0 0.0
    %640 = vmatpush1.msra.mxu0 %v623
    %641 = vmatprep.subr.mxu0 0.0
    %642 = vmatpush1.msra.mxu0 %v624
    %643 = vmatprep.subr.mxu0 0.0
    %644 = vmatpush1.msra.mxu0 %v625
    %645 = vmatprep.subr.mxu0 0.0
    %646 = vmatpush1.msra.mxu0 0.0
    %647 = vmatprep.subr.mxu0 0.0
    %648 = vmatpush1.msra.mxu0 0.0
    %649 = vmatprep.subr.mxu0 0.0
    %650 = vmatpush1.msra.mxu0 0.0
    %651 = vmatprep.subr.mxu0 0.0
    %652 = vmatpush1.msra.mxu0 0.0
    %653 = vmatprep.subr.mxu0 0.0
    %654 = vmatpush1.msra.mxu0 0.0
    %655 = vmatprep.subr.mxu0 0.0
    %656 = vmatpush1.msra.mxu0 0.0
    %657 = vmatprep.subr.mxu0 0.0
    %658 = vmatpush1.msra.mxu0 0.0
    %659 = vmatprep.subr.mxu0 0.0
    %660 = vmatpush1.msra.mxu0 0.0
    %661 = vmatprep.subr.mxu0 0.0
    %662 = vmatpush1.msra.mxu0 0.0
    %663 = vmatprep.subr.mxu0 0.0
    %664 = vmatpush1.msra.mxu0 0.0
    %665 = vmatprep.subr.mxu0 0.0
    %666 = vmatpush1.msra.mxu0 0.0
    %667 = vmatprep.subr.mxu0 0.0
    %668 = vmatpush1.msra.mxu0 0.0
    %669 = vmatprep.subr.mxu0 0.0
    %670 = vmatpush1.msra.mxu0 0.0
    %671 = vmatprep.subr.mxu0 0.0
    %672 = vmatpush1.msra.mxu0 0.0
    %673 = vmatprep.subr.mxu0 0.0
    %674 = vmatpush1.msra.mxu0 0.0
    %675 = vmatprep.subr.mxu0 0.0
    %676 = vmatpush1.msra.mxu0 0.0
    %677 = vmatprep.subr.mxu0 0.0
    %678 = vmatpush1.msra.mxu0 0.0
    %679 = vmatprep.subr.mxu0 0.0
    %680 = vmatpush1.msra.mxu0 0.0
    %681 = vmatprep.subr.mxu0 0.0
    %682 = vmatpush1.msra.mxu0 0.0
    %683 = vmatprep.subr.mxu0 0.0
    %684 = vmatpush1.msra.mxu0 0.0
    %685 = vmatprep.subr.mxu0 0.0
    %686 = vmatpush1.msra.mxu0 0.0
    %687 = vmatprep.subr.mxu0 0.0
    %688 = vmatpush1.msra.mxu0 0.0
    %689 = vmatprep.subr.mxu0 0.0
    %690 = vmatpush1.msra.mxu0 0.0
    %691 = vmatprep.subr.mxu0 0.0
    %692 = vmatpush1.msra.mxu0 0.0
    %693 = vmatprep.mubr.f32.mxu0 0.0
    %694 = vmatmul.mubr.f32.gmra.mrb[0].mxu0 %v627
    %v695 = vpop.f32.mrb[0].mxu0
    %v696 = vadd.f32 0.0, %v695
    %v697 = vpop.f32.mrb[0].mxu0
    %698 = vdwg.mxu0
    %v699 = vadd.f32 %v616, %v696
    %s700 = scalar_lea.vmem [#allocation5], 192
    %v701 = vld [vmem:[%s700] sm:$0xff]
    %v702 = vld [vmem:[%s700 + $0x8] sm:$0xff]
    %v703 = vld [vmem:[%s700 + $0x10] sm:$0xff]
    %v704 = vld [vmem:[%s700 + $0x18] sm:$0xff]
    %v705 = vld [vmem:[%s700 + $0x20] sm:$0xff]
    %v706 = vld [vmem:[%s700 + $0x28] sm:$0xff]
    %v707 = vld [vmem:[%s700 + $0x30] sm:$0xff]
    %v708 = vld [vmem:[%s700 + $0x38] sm:$0xff]
    %v710 = vsel %vm146, %v444, 0
    %712 = vmatprep.subr.mxu0 0.0
    %713 = vmatpush1.msra.mxu0 %v701
    %714 = vmatprep.subr.mxu0 0.0
    %715 = vmatpush1.msra.mxu0 %v702
    %716 = vmatprep.subr.mxu0 0.0
    %717 = vmatpush1.msra.mxu0 %v703
    %718 = vmatprep.subr.mxu0 0.0
    %719 = vmatpush1.msra.mxu0 %v704
    %720 = vmatprep.subr.mxu0 0.0
    %721 = vmatpush1.msra.mxu0 %v705
    %722 = vmatprep.subr.mxu0 0.0
    %723 = vmatpush1.msra.mxu0 %v706
    %724 = vmatprep.subr.mxu0 0.0
    %725 = vmatpush1.msra.mxu0 %v707
    %726 = vmatprep.subr.mxu0 0.0
    %727 = vmatpush1.msra.mxu0 %v708
    %728 = vmatprep.subr.mxu0 0.0
    %729 = vmatpush1.msra.mxu0 0.0
    %730 = vmatprep.subr.mxu0 0.0
    %731 = vmatpush1.msra.mxu0 0.0
    %732 = vmatprep.subr.mxu0 0.0
    %733 = vmatpush1.msra.mxu0 0.0
    %734 = vmatprep.subr.mxu0 0.0
    %735 = vmatpush1.msra.mxu0 0.0
    %736 = vmatprep.subr.mxu0 0.0
    %737 = vmatpush1.msra.mxu0 0.0
    %738 = vmatprep.subr.mxu0 0.0
    %739 = vmatpush1.msra.mxu0 0.0
    %740 = vmatprep.subr.mxu0 0.0
    %741 = vmatpush1.msra.mxu0 0.0
    %742 = vmatprep.subr.mxu0 0.0
    %743 = vmatpush1.msra.mxu0 0.0
    %744 = vmatprep.subr.mxu0 0.0
    %745 = vmatpush1.msra.mxu0 0.0
    %746 = vmatprep.subr.mxu0 0.0
    %747 = vmatpush1.msra.mxu0 0.0
    %748 = vmatprep.subr.mxu0 0.0
    %749 = vmatpush1.msra.mxu0 0.0
    %750 = vmatprep.subr.mxu0 0.0
    %751 = vmatpush1.msra.mxu0 0.0
    %752 = vmatprep.subr.mxu0 0.0
    %753 = vmatpush1.msra.mxu0 0.0
    %754 = vmatprep.subr.mxu0 0.0
    %755 = vmatpush1.msra.mxu0 0.0
    %756 = vmatprep.subr.mxu0 0.0
    %757 = vmatpush1.msra.mxu0 0.0
    %758 = vmatprep.subr.mxu0 0.0
    %759 = vmatpush1.msra.mxu0 0.0
    %760 = vmatprep.subr.mxu0 0.0
    %761 = vmatpush1.msra.mxu0 0.0
    %762 = vmatprep.subr.mxu0 0.0
    %763 = vmatpush1.msra.mxu0 0.0
    %764 = vmatprep.subr.mxu0 0.0
    %765 = vmatpush1.msra.mxu0 0.0
    %766 = vmatprep.subr.mxu0 0.0
    %767 = vmatpush1.msra.mxu0 0.0
    %768 = vmatprep.subr.mxu0 0.0
    %769 = vmatpush1.msra.mxu0 0.0
    %770 = vmatprep.subr.mxu0 0.0
    %771 = vmatpush1.msra.mxu0 0.0
    %772 = vmatprep.subr.mxu0 0.0
    %773 = vmatpush1.msra.mxu0 0.0
    %774 = vmatprep.subr.mxu0 0.0
    %775 = vmatpush1.msra.mxu0 0.0
    %776 = vmatprep.mubr.f32.mxu0 0.0
    %777 = vmatmul.mubr.f32.gmra.mrb[0].mxu0 %v710
    %v778 = vpop.f32.mrb[0].mxu0
    %v779 = vadd.f32 0.0, %v778
    %v780 = vpop.f32.mrb[0].mxu0
    %781 = vdwg.mxu0
    %v782 = vadd.f32 %v699, %v779
    %v783 = vmax.f32 %v782, 0.0
    %v784 = vld [vmem:[%s7] sm:$0x1]
    %v786 = vlaneseq
    %v787 = vshrl.u32 %v786, 7
    %v788 = vsub.s32 0, %v787
    %v789 = vrot.slane %v784, %v788
    %v791 = vmul.f32 %v783, %v789
    %792 = vadd.xlane.f32.xlu0 %v791
    %v793 = vpop.xlane.xlu0 %792
    %v794 = vld [vmem:[#allocation2] sm:$0x1]
    %v796 = vlaneseq
    %v797 = vshrl.u32 %v796, 7
    %v798 = vsub.s32 0, %v797
    %v799 = vrot.slane %v794, %v798
    %v801 = vadd.f32 %v793, %v799
    %v802 = vsub.f32 0.0, %v801
    %v803 = vmul.f32 %v802, 1.442695
    %v804 = vpow.pop %v803
    %v805 = vadd.f32 %v804, 1.0
    %v806 = vrcp.pop %v805
    %v807 = vmul.f32 1.0, %v806
    %vm808 = vcmask 7168
    %809 = vst.msk [vmem:[%s9] sm:$0xff] %vm808, %v807
    // Predicated region
    $region46: #{tpu_custom_call.1} parent=1 // pred_check
      _
    $region47: #{tpu_custom_call.1} parent=1 // pred_check_branch
      %811 = sbr.rel (0) target = $region49
    $region48: #{tpu_custom_call.1} parent=1 // pred_region
      _
    $region49: #{tpu_custom_call.1} parent=1 // pred_fallthru
      _
    // Predicated region
    $region50: #{tpu_custom_call.1} parent=1 // pred_check
      _
    $region51: #{tpu_custom_call.1} parent=1 // pred_check_branch
      %813 = sbr.rel (0) target = $region53
    $region52: #{tpu_custom_call.1} parent=1 // pred_region
      _
    $region53: #{tpu_custom_call.1} parent=1 // pred_fallthru
      _
    %814 = vsyncpa [#allocation4], 1
    %815 = vsyncpa [#allocation6], 1

</llo_original>
